<compile_context>
chip_gen: v6e
topology: v6e:2x2x1
jax: 0.10.0
libtpu: 0.0.40
codegen_flags: <defaults>
</compile_context>

<pallas_src>
import functools

import jax
import jax.numpy as jnp
from jax.experimental import pallas as pl
from jax.experimental.pallas import tpu as pltpu


def _tap_kernel(x_ref, o_ref, acc_ref, *, t_total: int, t_tile: int):
    """x_ref: (TB, TC, TT) input tile; o_ref: (TB, TC) output; acc_ref: f32 scratch."""
    k = pl.program_id(2)

    @pl.when(k == 0)
    def _():
        acc_ref[...] = jnp.zeros_like(acc_ref)

    # Load in the wire dtype, accumulate in float32.
    x = x_ref[...].astype(jnp.float32)

    if t_total % t_tile != 0:
        # Mask the padded tail of the last T tile so the mean is unbiased.
        t_idx = jax.lax.broadcasted_iota(jnp.int32, x.shape, dimension=2)
        x = jnp.where(k * t_tile + t_idx < t_total, x, 0.0)

    acc_ref[...] += jnp.sum(x, axis=-1)

    @pl.when(k == pl.num_programs(2) - 1)
    def _():
        o_ref[...] = (acc_ref[...] * (1.0 / t_total)).astype(o_ref.dtype)


def tap(feature_map: jax.Array, *, tb: int = 8, tc: int = 256, tt: int = 512) -> jax.Array:
    """Temporal average pooling: (B, C, T) -> (B, C)."""
    B, C, T = feature_map.shape

    # Tile selection: full extent when small (always legal), otherwise
    # hardware-aligned tiles (sublane multiple of 8, lane multiple of 128).
    TB = B if B <= tb else tb                       # output sublane dim
    TC = C if C <= tc else (tc // 128) * 128        # output lane dim -> lane-dense store
    TT = T if T <= tt else (tt // 128) * 128        # reduced axis, multiple of 128

    grid = (pl.cdiv(B, TB), pl.cdiv(C, TC), pl.cdiv(T, TT))
    kernel = functools.partial(_tap_kernel, t_total=T, t_tile=TT)

    return pl.pallas_call(
        kernel,
        out_shape=jax.ShapeDtypeStruct((B, C), feature_map.dtype),
        grid_spec=pltpu.PrefetchScalarGridSpec(
            num_scalar_prefetch=0,
            grid=grid,
            in_specs=[pl.BlockSpec((TB, TC, TT), lambda i, j, k: (i, j, k))],
            out_specs=pl.BlockSpec((TB, TC), lambda i, j, k: (i, j)),
            scratch_shapes=[pltpu.VMEM((TB, TC), jnp.float32)],
        ),
        compiler_params=pltpu.CompilerParams(
            dimension_semantics=("parallel", "parallel", "arbitrary")),
    )(feature_map)


if __name__ == "__main__":
    key = jax.random.PRNGKey(0)
    B, C, T = 2, 4, 16
    x = jax.random.normal(key, (B, C, T), dtype=jnp.float32)

    out = tap(x)
    jax.block_until_ready(out)

    # Reference check against plain-JAX mean over the temporal axis.
    ref = jnp.mean(x, axis=2)
    assert out.shape == (B, C)
    assert jnp.allclose(out, ref, atol=1e-5, rtol=1e-5)

    # Also exercise a shape that actually tiles (partial T tail + >1 T step).
    B2, C2, T2 = 16, 384, 1200
    x2 = jax.random.normal(jax.random.PRNGKey(1), (B2, C2, T2), dtype=jnp.bfloat16)
    out2 = tap(x2)
    jax.block_until_ready(out2)
    ref2 = jnp.mean(x2.astype(jnp.float32), axis=2).astype(jnp.bfloat16)
    assert out2.shape == (B2, C2)
    assert jnp.allclose(out2.astype(jnp.float32), ref2.astype(jnp.float32),
                        atol=2e-2, rtol=2e-2)

    print("KERNEL_OK")
</pallas_src>

<mosaic_0001>
module attributes {stable_mosaic.version = 11 : i64} {
  func.func @_tap_kernel(%arg0: i32, %arg1: i32, %arg2: i32, %arg3: memref<2x4x16xf32, #tpu.memory_space<vmem>>, %arg4: memref<2x4xf32, #tpu.memory_space<vmem>>, %arg5: memref<2x4xf32, #tpu.memory_space<vmem>>) attributes {dimension_semantics = [#tpu.dimension_semantics<parallel>, #tpu.dimension_semantics<parallel>, #tpu.dimension_semantics<arbitrary>], iteration_bounds = array<i64: 1, 1, 1>, scalar_prefetch = 0 : i64, scratch_operands = 1 : i64, tpu.core_type = #tpu.core_type<tc>, window_params = [{transform_indices = @transform_0, window_bounds = array<i64: 2, 4, 16>}, {transform_indices = @transform_1, window_bounds = array<i64: 2, 4>}]} {
    %c0_i32 = arith.constant 0 : i32
    %0 = arith.cmpi eq, %arg2, %c0_i32 : i32
    %1 = arith.extui %0 : i1 to i32
    %c0_i32_0 = arith.constant 0 : i32
    %2 = arith.cmpi ne, %1, %c0_i32_0 : i32
    scf.if %2 {
      %cst_9 = arith.constant 0.000000e+00 : f32
      %11 = vector.broadcast %cst_9 : f32 to vector<2x4xf32>
      %c0_10 = arith.constant 0 : index
      %c0_11 = arith.constant 0 : index
      %12 = vector.load %arg5[%c0_10, %c0_11] : memref<2x4xf32, #tpu.memory_space<vmem>>, vector<2x4xf32>
      tpu.vector_store %arg5[%c0_10, %c0_11], %11 {strides = array<i32>} : memref<2x4xf32, #tpu.memory_space<vmem>>, vector<2x4xf32>,
    } else {
    }
    %c0 = arith.constant 0 : index
    %c0_1 = arith.constant 0 : index
    %c0_2 = arith.constant 0 : index
    %3 = vector.load %arg3[%c0, %c0_1, %c0_2] : memref<2x4x16xf32, #tpu.memory_space<vmem>>, vector<2x4x16xf32>
    %c0_3 = arith.constant 0 : index
    %c0_4 = arith.constant 0 : index
    %4 = vector.load %arg5[%c0_3, %c0_4] : memref<2x4xf32, #tpu.memory_space<vmem>>, vector<2x4xf32>
    %cst = arith.constant dense<0.000000e+00> : vector<2x4xf32>
    %5 = vector.multi_reduction <add>, %3, %cst [2] : vector<2x4x16xf32> to vector<2x4xf32>
    %6 = arith.addf %4, %5 : vector<2x4xf32>
    %c0_5 = arith.constant 0 : index
    %c0_6 = arith.constant 0 : index
    %7 = vector.load %arg5[%c0_5, %c0_6] : memref<2x4xf32, #tpu.memory_space<vmem>>, vector<2x4xf32>
    tpu.vector_store %arg5[%c0_5, %c0_6], %6 {strides = array<i32>} : memref<2x4xf32, #tpu.memory_space<vmem>>, vector<2x4xf32>,
    %c0_i32_7 = arith.constant 0 : i32
    %8 = arith.cmpi eq, %arg2, %c0_i32_7 : i32
    %9 = arith.extui %8 : i1 to i32
    %c0_i32_8 = arith.constant 0 : i32
    %10 = arith.cmpi ne, %9, %c0_i32_8 : i32
    scf.if %10 {
      %c0_9 = arith.constant 0 : index
      %c0_10 = arith.constant 0 : index
      %11 = vector.load %arg5[%c0_9, %c0_10] : memref<2x4xf32, #tpu.memory_space<vmem>>, vector<2x4xf32>
      %cst_11 = arith.constant 6.250000e-02 : f32
      %12 = vector.broadcast %cst_11 : f32 to vector<2x4xf32>
      %13 = arith.mulf %11, %12 : vector<2x4xf32>
      %c0_12 = arith.constant 0 : index
      %c0_13 = arith.constant 0 : index
      %14 = vector.load %arg4[%c0_12, %c0_13] : memref<2x4xf32, #tpu.memory_space<vmem>>, vector<2x4xf32>
      tpu.vector_store %arg4[%c0_12, %c0_13], %13 {strides = array<i32>} : memref<2x4xf32, #tpu.memory_space<vmem>>, vector<2x4xf32>,
    } else {
    }
    return
  }
  func.func @transform_0(%arg0: i32, %arg1: i32, %arg2: i32) -> (i32, i32, i32) {
    %c0_i32 = arith.constant 0 : i32
    return %arg0, %arg1, %arg2 : i32, i32, i32
  }
  func.func @transform_1(%arg0: i32, %arg1: i32, %arg2: i32) -> (i32, i32) {
    %c0_i32 = arith.constant 0 : i32
    return %arg0, %arg1 : i32, i32
  }
}

</mosaic_0001>

<llo_original>
// kernel: tpu_custom_call.1
$region0: #{tpu_custom_call.1}
  #allocation0 [shape = 'u32[]', space=smem, size = 0x4, offset = 0x4, fixed_abs, tag = 'smem constant byte address 0x4 - core index']
  #allocation1 [shape = 'u32[144,128]{1,0:T(1,128)}', space=vmem, size = 0x12000, scoped, tag = 'internal scratch']
  #allocation2 [shape = 'f32[2,4]{1,0:T(2,128)}', space=vmem, size = 0x400, scoped, tag = 'scratch operand']
  %s0 = inlined_call_operand.hbm [shape: f32[2,4,16], index: 0, kind: input, shape index: {}]
  %s1 = inlined_call_operand.hbm [shape: f32[2,4], index: 1, kind: output, shape index: {}]
  %s2 = sld [smem:[#allocation0]]
  $region26: #{tpu_custom_call.1} parent=0
    _
  %s4 = ssub.s32 1, %s2
  %s5 = scalar_select 0, %s4, %s2
  $region1: #{tpu_custom_call.1} parent=0
    #allocation3 [shape = 'u8[4096]{0}', space=vmem, size = 0x1000, scoped, tag = 'input window, operand 0, single buffered']
    #allocation4 [shape = 's32[1]{0}', space=sflag, size = 0x4, scoped, tag = 'scoped memory for tpu_custom_call.1']
    #allocation5 [shape = 's32[1]{0}', space=sflag, size = 0x4, scoped, tag = 'scoped memory for tpu_custom_call.1']
    #allocation6 [shape = 'u8[1024]{0}', space=vmem, size = 0x400, scoped, tag = 'output window, operand 0, single buffered']
    %6 = vsyncpa [#allocation4], 0
    %7 = vsyncpa [#allocation5], 0
    // Predicated region
    $region2: #{tpu_custom_call.1} parent=1 // pred_check
      _
    $region3: #{tpu_custom_call.1} parent=1 // pred_check_branch
      %9 = sbr.rel (0) target = $region5
    $region4: #{tpu_custom_call.1} parent=1 // pred_region
      %s11 = ssub.s32 128, 128
      %12 = vsyncadd [#allocation4], %s11
      %s13 = sshll.u32 [#allocation3], 4
      %s14 = int_to_ptr.vmem [resolvable:$true] %s13
      %19 = dma.hbm_to_vmem [thread:$0]  %s0, 128, %s14, [#allocation4], 64, 64, 4
    $region5: #{tpu_custom_call.1} parent=1 // pred_fallthru
      _
    // Predicated region
    $region6: #{tpu_custom_call.1} parent=1 // pred_check
      _
    $region7: #{tpu_custom_call.1} parent=1 // pred_check_branch
      %21 = sbr.rel (0) target = $region9
    $region8: #{tpu_custom_call.1} parent=1 // pred_region
      %22 = dma.done [#allocation4], 128
    $region9: #{tpu_custom_call.1} parent=1 // pred_fallthru
      _
    %p23 = scmp.eq.s32.totalorder 0, 0
    // Predicated region
    $region10: #{tpu_custom_call.1} parent=1 // pred_check
      %p24 = pneg %p23
    $region11: #{tpu_custom_call.1} parent=1 // pred_check_branch
      %26 = sbr.rel (%p24) target = $region13
    $region12: #{tpu_custom_call.1} parent=1 // pred_region
      %vm27 = vcmask 25600
      %28 = vst.msk [vmem:[#allocation2] sm:$0x3] %vm27, 0.0
    $region13: #{tpu_custom_call.1} parent=1 // pred_fallthru
      _
    %v29 = vld [vmem:[#allocation3] sm:$0xf]
    %v30 = vld [vmem:[#allocation3 + $0x4] sm:$0xf]
    %v31 = vld [vmem:[#allocation2] sm:$0x3]
    %vm32 = vcmask 125952
    %v33 = vsel %vm32, %v29, 0.0
    %34 = vadd.xlane.f32.xlu0 %v33
    %v35 = vpop.xlane.xlu0 %34
    %v36 = vsel %vm32, %v30, 0.0
    %37 = vadd.xlane.f32.xlu0 %v36
    %v38 = vpop.xlane.xlu0 %37
    %v41 = vlaneseq
    %v42 = vand.u32 %v41, 127
    %v43 = vlaneseq
    %v44 = vshrl.u32 %v43, 7
    %v45 = vsub.s32 %v42, %v44
    %v46 = vrot.slane %v35, %v45
    %v47 = vlaneseq
    %v48 = vshrl.u32 %v47, 7
    %v49 = vsub.s32 %v42, %v48
    %v50 = vrot.slane %v38, %v49
    %vm51 = vcmask 1041409
    %v52 = vsel %vm51, %v50, %v46
    %v54 = vadd.f32 %v31, %v52
    %vm55 = vcmask 25600
    %56 = vst.msk [vmem:[#allocation2] sm:$0x3] %vm55, %v54
    // Predicated region
    $region14: #{tpu_custom_call.1} parent=1 // pred_check
      %p57 = pneg %p23
    $region15: #{tpu_custom_call.1} parent=1 // pred_check_branch
      %59 = sbr.rel (%p57) target = $region17
    $region16: #{tpu_custom_call.1} parent=1 // pred_region
      %v60 = vld [vmem:[#allocation2] sm:$0x3]
      %v61 = vmul.f32 %v60, 0.0625
      %62 = vst.msk [vmem:[#allocation6] sm:$0x3] %vm55, %v61
    $region17: #{tpu_custom_call.1} parent=1 // pred_fallthru
      _
    // Predicated region
    $region18: #{tpu_custom_call.1} parent=1 // pred_check
      _
    $region19: #{tpu_custom_call.1} parent=1 // pred_check_branch
      %64 = sbr.rel (0) target = $region21
    $region20: #{tpu_custom_call.1} parent=1 // pred_region
      %s66 = ssub.s32 32, 32
      %67 = vsyncadd [#allocation5], %s66
      %s69 = sshll.u32 [#allocation6], 4
      %s70 = int_to_ptr.vmem [resolvable:$true] %s69
      %72 = dma.vmem_to_hbm [thread:$0]  %s70, 32, %s1, [#allocation5]
    $region21: #{tpu_custom_call.1} parent=1 // pred_fallthru
      _
    // Predicated region
    $region22: #{tpu_custom_call.1} parent=1 // pred_check
      _
    $region23: #{tpu_custom_call.1} parent=1 // pred_check_branch
      %74 = sbr.rel (0) target = $region25
    $region24: #{tpu_custom_call.1} parent=1 // pred_region
      %75 = dma.done [#allocation5], 32
    $region25: #{tpu_custom_call.1} parent=1 // pred_fallthru
      _
    %76 = vsyncpa [#allocation4], 1
    %77 = vsyncpa [#allocation5], 1

</llo_original>
